<compile_context>
chip_gen: v6e
topology: v6e:2x2x1
jax: 0.10.0
libtpu: 0.0.40
codegen_flags: <defaults>
</compile_context>

<pallas_src>
import functools

import jax
import jax.numpy as jnp
from jax.experimental import pallas as pl
from jax.experimental.pallas import tpu as pltpu

LANES = 128
SUBLANES = 8
MAX_TILE_ROWS = 4096                 # (4096,128) f32 = 2 MiB / input / buffer
VMEM_LIMIT_BYTES = 32 * 1024 * 1024  # covers v5e's 16 MiB scoped default


def _cdiv(a, b):
    return -(-a // b)


def _elementwise_losses(x, t):
    """Per-element BCE-with-logits and MSE terms, in f32."""
    x = x.astype(jnp.float32)
    t = t.astype(jnp.float32)
    d = x - t
    mse = d * d
    # Numerically stable BCEWithLogits (matches PyTorch):
    #   max(x, 0) - x*t + log1p(exp(-|x|))
    bce = jnp.maximum(x, 0.0) - x * t + jnp.log1p(jnp.exp(-jnp.abs(x)))
    return bce, mse


def _combined_loss_kernel(x_ref, t_ref, o_ref, *, tile_rows, n_rows,
                          w_bce, w_mse):
    i = pl.program_id(0)

    def emit(mask_tail):
        bce, mse = _elementwise_losses(x_ref[...], t_ref[...])
        if mask_tail:
            # Partial boundary block: rows >= (n_rows - i*tile_rows) hold
            # unspecified padding -> mask BOTH losses. Row units, no i32
            # overflow risk.
            valid = n_rows - i * tile_rows
            row_ids = jax.lax.broadcasted_iota(
                jnp.int32, (tile_rows, LANES), 0)
            keep = row_ids < valid
            bce = jnp.where(keep, bce, 0.0)
            mse = jnp.where(keep, mse, 0.0)
        # Vreg-shaped (8,128) partial sums: pure VPU adds across whole vregs;
        # the cross-lane reduction happens once, outside the kernel.
        bce_p = jnp.sum(
            bce.reshape(tile_rows // SUBLANES, SUBLANES, LANES), axis=0)
        mse_p = jnp.sum(
            mse.reshape(tile_rows // SUBLANES, SUBLANES, LANES), axis=0)
        o_ref[...] = w_bce * bce_p + w_mse * mse_p

    if n_rows % tile_rows == 0:
        # No partial block exists: statically skip all masking.
        emit(False)
    else:
        last = pl.num_programs(0) - 1

        @pl.when(i < last)
        def _full():
            emit(False)

        @pl.when(i == last)
        def _tail():
            emit(True)


def combined_loss(outputs, targets, loss_weights=(0.5, 0.5), *,
                  max_tile_rows=MAX_TILE_ROWS):
    """Pallas implementation of CombinedLoss([BCEWithLogitsLoss, MSELoss])."""
    assert outputs.shape == targets.shape
    w_bce = float(loss_weights[0])
    w_mse = float(loss_weights[1])
    n_elems = outputs.size

    x_flat = outputs.reshape(-1)
    t_flat = targets.reshape(-1)

    rem = n_elems % LANES
    n_main = n_elems - rem
    n_rows = n_main // LANES

    # Tiny inputs: a fused XLA expression beats kernel launch + tiling cost.
    if n_rows < SUBLANES:
        bce, mse = _elementwise_losses(x_flat, t_flat)
        return (w_bce * jnp.sum(bce) + w_mse * jnp.sum(mse)) / n_elems

    # < 128-element ragged lane remainder: tiny plain-JAX slice.
    tail = 0.0
    if rem:
        bce_t, mse_t = _elementwise_losses(x_flat[n_main:], t_flat[n_main:])
        tail = w_bce * jnp.sum(bce_t) + w_mse * jnp.sum(mse_t)
        # NOTE: this slice copies the main part once; only paid when
        # n_elems % 128 != 0 (rare for NN tensors).
        x_flat = x_flat[:n_main]
        t_flat = t_flat[:n_main]

    # Zero-copy reshape to a lane-dense (rows, 128) view; no jnp.pad.
    x2d = x_flat.reshape(n_rows, LANES)
    t2d = t_flat.reshape(n_rows, LANES)

    # Tile rows: multiple of 8, never exceeding the array's row count.
    tile_rows = min(int(max_tile_rows), (n_rows // SUBLANES) * SUBLANES)
    num_blocks = _cdiv(n_rows, tile_rows)

    kernel = functools.partial(
        _combined_loss_kernel,
        tile_rows=tile_rows, n_rows=n_rows, w_bce=w_bce, w_mse=w_mse)

    in_bytes = (jnp.dtype(x2d.dtype).itemsize + jnp.dtype(t2d.dtype).itemsize)
    cost = pl.CostEstimate(
        flops=10 * n_rows * LANES,
        transcendentals=2 * n_rows * LANES,
        bytes_accessed=n_rows * LANES * in_bytes
        + num_blocks * SUBLANES * LANES * 4,
    )

    partials = pl.pallas_call(
        kernel,
        out_shape=jax.ShapeDtypeStruct((num_blocks, SUBLANES, LANES),
                                       jnp.float32),
        grid_spec=pltpu.PrefetchScalarGridSpec(
            num_scalar_prefetch=0,
            grid=(num_blocks,),
            in_specs=[
                pl.BlockSpec((tile_rows, LANES), lambda i: (i, 0)),
                pl.BlockSpec((tile_rows, LANES), lambda i: (i, 0)),
            ],
            out_specs=pl.BlockSpec((None, SUBLANES, LANES),
                                   lambda i: (i, 0, 0)),
        ),
        compiler_params=pltpu.CompilerParams(
            dimension_semantics=("parallel",),
            vmem_limit_bytes=VMEM_LIMIT_BYTES),
        cost_estimate=cost,
    )(x2d, t2d)

    # Single tiny cross-lane reduction + mean normalization (trivial XLA op).
    return (jnp.sum(partials) + tail) / n_elems


def _reference(outputs, targets, loss_weights=(0.5, 0.5)):
    x = outputs.astype(jnp.float32)
    t = targets.astype(jnp.float32)
    bce = jnp.mean(jnp.maximum(x, 0.0) - x * t + jnp.log1p(jnp.exp(-jnp.abs(x))))
    mse = jnp.mean((x - t) ** 2)
    return loss_weights[0] * bce + loss_weights[1] * mse


if __name__ == "__main__":
    key = jax.random.PRNGKey(0)
    k1, k2, k3, k4, k5, k6 = jax.random.split(key, 6)

    # 1) NCHW inputs, small shapes: batch=2, channels=4, spatial=16x16.
    #    2048 elems -> single-block kernel path, no masking.
    outputs = jax.random.normal(k1, (2, 4, 16, 16), dtype=jnp.float32)  # logits
    targets = (jax.random.uniform(k2, (2, 4, 16, 16)) > 0.5).astype(jnp.float32)
    loss = combined_loss(outputs, targets)
    jax.block_until_ready(loss)
    ref = _reference(outputs, targets)
    assert jnp.allclose(loss, ref, rtol=1e-5, atol=1e-5), (loss, ref)

    # 2) Same inputs, tiny tile -> multi-block grid path (exercises indexing).
    loss_mb = combined_loss(outputs, targets, max_tile_rows=8)
    jax.block_until_ready(loss_mb)
    assert jnp.allclose(loss_mb, ref, rtol=1e-5, atol=1e-5), (loss_mb, ref)

    # 3) Odd element count (1155): partial boundary block mask + <128 JAX tail.
    outputs2 = jax.random.normal(k3, (3, 5, 7, 11), dtype=jnp.float32)
    targets2 = (jax.random.uniform(k4, (3, 5, 7, 11)) > 0.5).astype(jnp.float32)
    loss2 = combined_loss(outputs2, targets2, max_tile_rows=8)
    jax.block_until_ready(loss2)
    ref2 = _reference(outputs2, targets2)
    assert jnp.allclose(loss2, ref2, rtol=1e-5, atol=1e-5), (loss2, ref2)

    # 4) bf16 inputs streamed in native dtype (cast to f32 in-kernel).
    outputs3 = jax.random.normal(k5, (2, 4, 16, 16)).astype(jnp.bfloat16)
    targets3 = (jax.random.uniform(k6, (2, 4, 16, 16)) > 0.5).astype(jnp.bfloat16)
    loss3 = combined_loss(outputs3, targets3)
    jax.block_until_ready(loss3)
    ref3 = _reference(outputs3, targets3)
    assert jnp.allclose(loss3, ref3, rtol=1e-5, atol=1e-5), (loss3, ref3)

    # 5) Tiny input -> pure-JAX fallback path.
    loss4 = combined_loss(outputs[:1, :1, :2, :3], targets[:1, :1, :2, :3])
    jax.block_until_ready(loss4)
    ref4 = _reference(outputs[:1, :1, :2, :3], targets[:1, :1, :2, :3])
    assert jnp.allclose(loss4, ref4, rtol=1e-5, atol=1e-5), (loss4, ref4)

    print("KERNEL_OK")
</pallas_src>

<mosaic_0001>
module attributes {stable_mosaic.version = 11 : i64} {
  func.func @_combined_loss_kernel(%arg0: i32, %arg1: memref<16x128xf32, #tpu.memory_space<vmem>>, %arg2: memref<16x128xf32, #tpu.memory_space<vmem>>, %arg3: memref<1x8x128xf32, #tpu.memory_space<vmem>>) attributes {dimension_semantics = [#tpu.dimension_semantics<parallel>], iteration_bounds = array<i64: 1>, scalar_prefetch = 0 : i64, scratch_operands = 0 : i64, tpu.core_type = #tpu.core_type<tc>, window_params = [{transform_indices = @transform_0, window_bounds = array<i64: 16, 128>}, {transform_indices = @transform_1, window_bounds = array<i64: 16, 128>}, {transform_indices = @transform_2, window_bounds = array<i64: 1, 8, 128>}]} {
    %c0 = arith.constant 0 : index
    %c0_0 = arith.constant 0 : index
    %0 = vector.load %arg1[%c0, %c0_0] : memref<16x128xf32, #tpu.memory_space<vmem>>, vector<16x128xf32>
    %c0_1 = arith.constant 0 : index
    %c0_2 = arith.constant 0 : index
    %1 = vector.load %arg2[%c0_1, %c0_2] : memref<16x128xf32, #tpu.memory_space<vmem>>, vector<16x128xf32>
    %2 = arith.subf %0, %1 : vector<16x128xf32>
    %3 = arith.mulf %2, %2 : vector<16x128xf32>
    %cst = arith.constant 0.000000e+00 : f32
    %4 = vector.broadcast %cst : f32 to vector<16x128xf32>
    %5 = arith.maximumf %0, %4 : vector<16x128xf32>
    %6 = arith.mulf %0, %1 : vector<16x128xf32>
    %7 = arith.subf %5, %6 : vector<16x128xf32>
    %8 = math.absf %0 : vector<16x128xf32>
    %cst_3 = arith.constant 0.000000e+00 : f32
    %9 = vector.broadcast %cst_3 : f32 to vector<16x128xf32>
    %10 = arith.subf %9, %8 : vector<16x128xf32>
    %11 = math.exp %10 : vector<16x128xf32>
    %12 = math.log1p %11 : vector<16x128xf32>
    %13 = arith.addf %7, %12 : vector<16x128xf32>
    %14 = vector.shape_cast %13 : vector<16x128xf32> to vector<2x8x128xf32>
    %cst_4 = arith.constant dense<0.000000e+00> : vector<8x128xf32>
    %15 = vector.multi_reduction <add>, %14, %cst_4 [0] : vector<2x8x128xf32> to vector<8x128xf32>
    %16 = vector.shape_cast %3 : vector<16x128xf32> to vector<2x8x128xf32>
    %cst_5 = arith.constant dense<0.000000e+00> : vector<8x128xf32>
    %17 = vector.multi_reduction <add>, %16, %cst_5 [0] : vector<2x8x128xf32> to vector<8x128xf32>
    %cst_6 = arith.constant 5.000000e-01 : f32
    %18 = vector.broadcast %cst_6 : f32 to vector<8x128xf32>
    %19 = arith.mulf %18, %15 : vector<8x128xf32>
    %cst_7 = arith.constant 5.000000e-01 : f32
    %20 = vector.broadcast %cst_7 : f32 to vector<8x128xf32>
    %21 = arith.mulf %20, %17 : vector<8x128xf32>
    %22 = arith.addf %19, %21 : vector<8x128xf32>
    %c0_8 = arith.constant 0 : index
    %c0_9 = arith.constant 0 : index
    %c0_10 = arith.constant 0 : index
    %23 = vector.load %arg3[%c0_8, %c0_9, %c0_10] : memref<1x8x128xf32, #tpu.memory_space<vmem>>, vector<1x8x128xf32>
    %24 = vector.shape_cast %23 : vector<1x8x128xf32> to vector<8x128xf32>
    %25 = vector.shape_cast %22 : vector<8x128xf32> to vector<1x8x128xf32>
    tpu.vector_store %arg3[%c0_8, %c0_9, %c0_10], %25 {strides = array<i32>} : memref<1x8x128xf32, #tpu.memory_space<vmem>>, vector<1x8x128xf32>,
    return
  }
  func.func @transform_0(%arg0: i32) -> (i32, i32) {
    %c0_i32 = arith.constant 0 : i32
    %c0_i32_0 = arith.constant 0 : i32
    return %arg0, %c0_i32 : i32, i32
  }
  func.func @transform_1(%arg0: i32) -> (i32, i32) {
    %c0_i32 = arith.constant 0 : i32
    %c0_i32_0 = arith.constant 0 : i32
    return %arg0, %c0_i32 : i32, i32
  }
  func.func @transform_2(%arg0: i32) -> (i32, i32, i32) {
    %c0_i32 = arith.constant 0 : i32
    %c0_i32_0 = arith.constant 0 : i32
    %c0_i32_1 = arith.constant 0 : i32
    return %arg0, %c0_i32, %c0_i32_0 : i32, i32, i32
  }
}

</mosaic_0001>

<llo_original>
// kernel: tpu_custom_call.1
$region0: #{tpu_custom_call.1}
  #allocation0 [shape = 'u32[]', space=smem, size = 0x4, offset = 0x4, fixed_abs, tag = 'smem constant byte address 0x4 - core index']
  #allocation1 [shape = 'u32[144,128]{1,0:T(1,128)}', space=vmem, size = 0x12000, scoped, tag = 'internal scratch']
  %s0 = inlined_call_operand.hbm [shape: f32[16,128], index: 0, kind: input, shape index: {}]
  %s1 = inlined_call_operand.hbm [shape: f32[16,128], index: 1, kind: input, shape index: {}]
  %s2 = inlined_call_operand.hbm [shape: f32[1,8,128], index: 2, kind: output, shape index: {}]
  %s3 = sld [smem:[#allocation0]]
  $region26: #{tpu_custom_call.1} parent=0
    _
  %s5 = ssub.s32 1, %s3
  %s6 = scalar_select 0, %s5, %s3
  $region1: #{tpu_custom_call.1} parent=0
    #allocation2 [shape = 'u8[8192]{0}', space=vmem, size = 0x2000, scoped, tag = 'input window, operand 0, single buffered']
    #allocation3 [shape = 's32[1]{0}', space=sflag, size = 0x4, scoped, tag = 'scoped memory for tpu_custom_call.1']
    #allocation4 [shape = 's32[1]{0}', space=sflag, size = 0x4, scoped, tag = 'scoped memory for tpu_custom_call.1']
    #allocation5 [shape = 'u8[8192]{0}', space=vmem, size = 0x2000, scoped, tag = 'input window, operand 1, single buffered']
    #allocation6 [shape = 's32[1]{0}', space=sflag, size = 0x4, scoped, tag = 'scoped memory for tpu_custom_call.1']
    #allocation7 [shape = 'u8[4096]{0}', space=vmem, size = 0x1000, scoped, tag = 'output window, operand 0, single buffered']
    %7 = vsyncpa [#allocation3], 0
    %8 = vsyncpa [#allocation6], 0
    %9 = vsyncpa [#allocation4], 0
    // Predicated region
    $region2: #{tpu_custom_call.1} parent=1 // pred_check
      _
    $region3: #{tpu_custom_call.1} parent=1 // pred_check_branch
      %11 = sbr.rel (0) target = $region5
    $region4: #{tpu_custom_call.1} parent=1 // pred_region
      %s13 = ssub.s32 256, 256
      %14 = vsyncadd [#allocation3], %s13
      %s15 = sshll.u32 [#allocation2], 4
      %s16 = int_to_ptr.vmem [resolvable:$true] %s15
      %21 = dma.hbm_to_vmem [thread:$0]  %s0, 256, %s16, [#allocation3], 128, 128, 8
    $region5: #{tpu_custom_call.1} parent=1 // pred_fallthru
      _
    // Predicated region
    $region6: #{tpu_custom_call.1} parent=1 // pred_check
      _
    $region7: #{tpu_custom_call.1} parent=1 // pred_check_branch
      %23 = sbr.rel (0) target = $region9
    $region8: #{tpu_custom_call.1} parent=1 // pred_region
      %s25 = ssub.s32 256, 256
      %26 = vsyncadd [#allocation6], %s25
      %s27 = sshll.u32 [#allocation5], 4
      %s28 = int_to_ptr.vmem [resolvable:$true] %s27
      %33 = dma.hbm_to_vmem [thread:$0]  %s1, 256, %s28, [#allocation6], 128, 128, 8
    $region9: #{tpu_custom_call.1} parent=1 // pred_fallthru
      _
    // Predicated region
    $region10: #{tpu_custom_call.1} parent=1 // pred_check
      _
    $region11: #{tpu_custom_call.1} parent=1 // pred_check_branch
      %35 = sbr.rel (0) target = $region13
    $region12: #{tpu_custom_call.1} parent=1 // pred_region
      %36 = dma.done [#allocation3], 256
    $region13: #{tpu_custom_call.1} parent=1 // pred_fallthru
      _
    // Predicated region
    $region14: #{tpu_custom_call.1} parent=1 // pred_check
      _
    $region15: #{tpu_custom_call.1} parent=1 // pred_check_branch
      %38 = sbr.rel (0) target = $region17
    $region16: #{tpu_custom_call.1} parent=1 // pred_region
      %39 = dma.done [#allocation6], 256
    $region17: #{tpu_custom_call.1} parent=1 // pred_fallthru
      _
    %v40 = vld [vmem:[#allocation2] sm:$0xff]
    %v41 = vld [vmem:[#allocation2 + $0x8] sm:$0xff]
    %v42 = vld [vmem:[#allocation5] sm:$0xff]
    %v43 = vld [vmem:[#allocation5 + $0x8] sm:$0xff]
    %v44 = vsub.f32 %v40, %v42
    %v45 = vsub.f32 %v41, %v43
    %v46 = vmul.f32 %v44, %v44
    %v47 = vmul.f32 %v45, %v45
    %v48 = vmax.f32 %v40, 0.0
    %v49 = vmax.f32 %v41, 0.0
    %v50 = vmul.f32 %v40, %v42
    %v51 = vmul.f32 %v41, %v43
    %v52 = vsub.f32 %v48, %v50
    %v53 = vsub.f32 %v49, %v51
    %v54 = vand.u32 2147483647, %v40
    %v55 = vand.u32 2147483647, %v41
    %v56 = vsub.f32 0.0, %v54
    %v57 = vsub.f32 0.0, %v55
    %v58 = vmul.f32 %v56, 1.442695
    %v59 = vpow.pop %v58
    %v60 = vmul.f32 %v57, 1.442695
    %v61 = vpow.pop %v60
    %v62 = vadd.f32 %v59, 1.0
    %v63 = vlog2.pop %v62
    %v64 = vmul.f32 %v63, 0.6931472
    %v65 = vmul.f32 -0.5, %v59
    %v66 = vadd.f32 %v65, 1.0
    %v67 = vmul.f32 %v66, %v59
    %v68 = vand.u32 2147483647, %v59
    %vm69 = vcmp.lt.f32.partialorder %v68, 0.0004427343
    %v70 = vsel %vm69, %v67, %v64
    %v71 = vadd.f32 %v61, 1.0
    %v72 = vlog2.pop %v71
    %v73 = vmul.f32 %v72, 0.6931472
    %v74 = vmul.f32 -0.5, %v61
    %v75 = vadd.f32 %v74, 1.0
    %v76 = vmul.f32 %v75, %v61
    %v77 = vand.u32 2147483647, %v61
    %vm78 = vcmp.lt.f32.partialorder %v77, 0.0004427343
    %v79 = vsel %vm78, %v76, %v73
    %v80 = vadd.f32 %v52, %v70
    %v81 = vadd.f32 %v53, %v79
    %v82 = vadd.f32 %v80, %v81
    %v83 = vadd.f32 %v46, %v47
    %v84 = vmul.f32 %v82, 0.5
    %v85 = vmul.f32 %v83, 0.5
    %v86 = vadd.f32 %v84, %v85
    %87 = vst [vmem:[#allocation7] sm:$0xff] %v86
    // Predicated region
    $region18: #{tpu_custom_call.1} parent=1 // pred_check
      _
    $region19: #{tpu_custom_call.1} parent=1 // pred_check_branch
      %89 = sbr.rel (0) target = $region21
    $region20: #{tpu_custom_call.1} parent=1 // pred_region
      %s91 = ssub.s32 128, 128
      %92 = vsyncadd [#allocation4], %s91
      %s94 = sshll.u32 [#allocation7], 4
      %s95 = int_to_ptr.vmem [resolvable:$true] %s94
      %97 = dma.vmem_to_hbm [thread:$0]  %s95, 128, %s2, [#allocation4]
    $region21: #{tpu_custom_call.1} parent=1 // pred_fallthru
      _
    // Predicated region
    $region22: #{tpu_custom_call.1} parent=1 // pred_check
      _
    $region23: #{tpu_custom_call.1} parent=1 // pred_check_branch
      %99 = sbr.rel (0) target = $region25
    $region24: #{tpu_custom_call.1} parent=1 // pred_region
      %100 = dma.done [#allocation4], 128
    $region25: #{tpu_custom_call.1} parent=1 // pred_fallthru
      _
    %101 = vsyncpa [#allocation3], 1
    %102 = vsyncpa [#allocation6], 1
    %103 = vsyncpa [#allocation4], 1

</llo_original>
